<compile_context>
chip_gen: v7x
topology: tpu7x:2x2x1
jax: 0.10.0
libtpu: 0.0.40
codegen_flags: <defaults>
</compile_context>

<pallas_src>
import functools

import jax
import jax.numpy as jnp
from jax import lax
from jax.experimental import pallas as pl
from jax.experimental.pallas import tpu as pltpu


def _round_up(n, m):
    return ((n + m - 1) // m) * m


def rnn_kernel(ids_ref, table_ref, whh_ref, wfc_ref, bfc_ref, out_ref,
               p_scratch, *, seq_len, batch, unroll):
    """Full forward pass, one invocation.

    Phase 1 (prologue, off the serial path):
        P[t, b, :] = proj_table[token(t, b)]     -- scalar-id row gather
    Phase 2 (serial critical path):
        h_t = tanh(P[t] + h_{t-1} @ W_hh)        -- T dependent MXU steps
    Phase 3:
        out = h_T @ W_fc + b_fc                  -- lane-dense store
    """
    _, Bp, Hp = p_scratch.shape

    # --- Phase 1: zero-init (padded batch rows stay exactly 0), then gather
    # the fused (emb @ W_ih + b_ih + b_hh) rows for every (t, b) token.
    p_scratch[...] = jnp.zeros_like(p_scratch)

    def gather_t(t, carry):
        for b in range(batch):                       # static inner unroll
            tok = ids_ref[t * batch + b]             # scalar read from SMEM
            p_scratch[t, pl.ds(b, 1), :] = table_ref[pl.ds(tok, 1), :]
        return carry

    lax.fori_loop(0, seq_len, gather_t, 0, unroll=unroll)

    # --- Phase 2: latency-bound recurrence; only h @ W_hh + tanh per step.
    def step(t, h):
        pre = p_scratch[t] + jnp.dot(h, whh_ref[...],
                                     preferred_element_type=jnp.float32)
        return jnp.tanh(pre)

    h0 = jnp.zeros((Bp, Hp), jnp.float32)
    h_T = lax.fori_loop(0, seq_len, step, h0, unroll=unroll)

    # --- Phase 3: FC head on the final hidden state (Op = 128 -> unmasked vst).
    out_ref[...] = (jnp.dot(h_T, wfc_ref[...],
                            preferred_element_type=jnp.float32)
                    + bfc_ref[...]).astype(out_ref.dtype)


def rnn_forward(text, params):
    """text: (seq_len, batch) int32.  Returns (batch, output_dim) float32."""
    emb = params["embedding"].astype(jnp.float32)   # (V, E)
    w_ih = params["w_ih"]                           # (E, H)  (= weight_ih_l0.T)
    w_hh = params["w_hh"]                           # (H, H)  (= weight_hh_l0.T)
    bias = params["b_ih"] + params["b_hh"]          # (1, H)  fused RNN biases
    w_fc = params["w_fc"]                           # (H, O)  (= fc.weight.T)
    b_fc = params["b_fc"]                           # (1, O)

    T, B = text.shape
    V, _ = emb.shape
    H = w_hh.shape[0]
    O = w_fc.shape[1]

    # Fold embedding lookup + input projection + biases into one small table:
    # proj[v] = emb[v] @ W_ih + (b_ih + b_hh).  Gathered per-token in-kernel.
    proj = jnp.dot(emb, w_ih, precision=jax.lax.Precision.HIGHEST) + bias  # (V, H)

    # Pad to vreg / MXU friendly shapes: batch -> 8 sublanes, H/O -> 128 lanes.
    # (For throughput serving, pad batch to 128/256 to fill MXU rows; the
    #  per-step latency is nearly flat up to the MXU depth.)
    Bp = _round_up(B, 8)
    Hp = _round_up(H, 128)
    Op = _round_up(O, 128)
    Vp = _round_up(V, 8)

    def pad2(a, r, c):
        return jnp.pad(a, ((0, r - a.shape[0]), (0, c - a.shape[1])))

    proj_p = pad2(proj, Vp, Hp)
    whh_p = pad2(w_hh, Hp, Hp)
    wfc_p = pad2(w_fc, Hp, Op)
    bfc_p = pad2(b_fc, 1, Op)

    ids = text.reshape(-1).astype(jnp.int32)        # (T*B,) time-major token ids

    # VMEM budget from the real resident set (table + weights + P + out),
    # with 2x headroom for compiler-internal scratch, capped at v7x's 64 MiB/TC.
    resident_bytes = 4 * (Vp * Hp + Hp * Hp + Hp * Op + Op
                          + T * Bp * Hp + Bp * Op)
    vmem_limit = min(64 * 1024 * 1024,
                     max(8 * 1024 * 1024, 2 * resident_bytes + (1 << 20)))

    out_padded = pl.pallas_call(
        functools.partial(rnn_kernel, seq_len=T, batch=B, unroll=min(T, 8)),
        out_shape=jax.ShapeDtypeStruct((Bp, Op), jnp.float32),
        in_specs=[
            pl.BlockSpec(memory_space=pltpu.MemorySpace.SMEM),   # token ids
            pl.BlockSpec(memory_space=pltpu.MemorySpace.VMEM),   # fused proj table
            pl.BlockSpec(memory_space=pltpu.MemorySpace.VMEM),   # W_hh
            pl.BlockSpec(memory_space=pltpu.MemorySpace.VMEM),   # W_fc
            pl.BlockSpec(memory_space=pltpu.MemorySpace.VMEM),   # b_fc
        ],
        out_specs=pl.BlockSpec(memory_space=pltpu.MemorySpace.VMEM),
        scratch_shapes=[pltpu.VMEM((T, Bp, Hp), jnp.float32)],
        compiler_params=pltpu.CompilerParams(vmem_limit_bytes=vmem_limit),
    )(ids, proj_p, whh_p, wfc_p, bfc_p)

    return out_padded[:B, :O]


def init_params(key, vocab, embedding_dim, hidden_dim, output_dim):
    ks = jax.random.split(key, 7)
    scale = 0.1
    return {
        "embedding": scale * jax.random.normal(ks[0], (vocab, embedding_dim),
                                               jnp.float32),
        "w_ih": scale * jax.random.normal(ks[1], (embedding_dim, hidden_dim),
                                          jnp.float32),
        "w_hh": scale * jax.random.normal(ks[2], (hidden_dim, hidden_dim),
                                          jnp.float32),
        "b_ih": scale * jax.random.normal(ks[3], (1, hidden_dim), jnp.float32),
        "b_hh": scale * jax.random.normal(ks[4], (1, hidden_dim), jnp.float32),
        "w_fc": scale * jax.random.normal(ks[5], (hidden_dim, output_dim),
                                          jnp.float32),
        "b_fc": scale * jax.random.normal(ks[6], (1, output_dim), jnp.float32),
    }


def reference_forward(text, params):
    """Pure-JAX reference matching PyTorch nn.RNN(tanh) + Linear semantics,
    computed in true float32 (Precision.HIGHEST)."""
    hp = jax.lax.Precision.HIGHEST
    x = params["embedding"][text].astype(jnp.float32)     # (T, B, E)
    B = x.shape[1]
    H = params["w_hh"].shape[0]
    h = jnp.zeros((B, H), jnp.float32)
    for t in range(x.shape[0]):
        h = jnp.tanh(jnp.dot(x[t], params["w_ih"], precision=hp)
                     + params["b_ih"]
                     + jnp.dot(h, params["w_hh"], precision=hp)
                     + params["b_hh"])
    return jnp.dot(h, params["w_fc"], precision=hp) + params["b_fc"]


if __name__ == "__main__":
    # Small shapes implied by the module: vocab (input_dim)=50, embedding_dim=32,
    # hidden_dim=32, output_dim=4, seq_len=8, batch=2.
    vocab, E, H, O = 50, 32, 32, 4
    seq_len, batch = 8, 2

    key = jax.random.PRNGKey(0)
    k_param, k_text = jax.random.split(key)
    params = init_params(k_param, vocab, E, H, O)
    text = jax.random.randint(k_text, (seq_len, batch), 0, vocab, jnp.int32)

    out = jax.block_until_ready(rnn_forward(text, params))
    ref = reference_forward(text, params)

    assert out.shape == (batch, O)
    # Tolerance accommodates the TPU MXU's reduced-precision (bf16-pass) handling
    # of f32 matmuls vs. the true-f32 reference; a real bug would be O(1e-1) off.
    assert jnp.allclose(out, ref, atol=1e-3, rtol=1e-3), (out, ref)

    print("KERNEL_OK")
</pallas_src>

<mosaic_0001>
module attributes {stable_mosaic.version = 11 : i64} {
  func.func @rnn_kernel(%arg0: memref<16xi32, #tpu.memory_space<smem>>, %arg1: memref<56x128xf32, #tpu.memory_space<vmem>>, %arg2: memref<128x128xf32, #tpu.memory_space<vmem>>, %arg3: memref<128x128xf32, #tpu.memory_space<vmem>>, %arg4: memref<1x128xf32, #tpu.memory_space<vmem>>, %arg5: memref<8x128xf32, #tpu.memory_space<vmem>>, %arg6: memref<8x8x128xf32, #tpu.memory_space<vmem>>) attributes {dimension_semantics = [], scalar_prefetch = 0 : i64, scratch_operands = 1 : i64, tpu.core_type = #tpu.core_type<tc>} {
    %cst = arith.constant 0.000000e+00 : f32
    %0 = vector.broadcast %cst : f32 to vector<8x8x128xf32>
    %c0 = arith.constant 0 : index
    %c0_0 = arith.constant 0 : index
    %c0_1 = arith.constant 0 : index
    %1 = vector.load %arg6[%c0, %c0_0, %c0_1] : memref<8x8x128xf32, #tpu.memory_space<vmem>>, vector<8x8x128xf32>
    tpu.vector_store %arg6[%c0, %c0_0, %c0_1], %0 {strides = array<i32>} : memref<8x8x128xf32, #tpu.memory_space<vmem>>, vector<8x8x128xf32>,
    %c0_i32 = arith.constant 0 : i32
    %c2_i32 = arith.constant 2 : i32
    %2 = arith.muli %c0_i32, %c2_i32 : i32
    %c0_i32_2 = arith.constant 0 : i32
    %3 = arith.addi %2, %c0_i32_2 : i32
    %4 = arith.index_cast %3 : i32 to index
    %5 = memref.load %arg0[%4] : memref<16xi32, #tpu.memory_space<smem>>
    %6 = arith.index_cast %5 : i32 to index
    %c0_3 = arith.constant 0 : index
    %7 = vector.load %arg1[%6, %c0_3] : memref<56x128xf32, #tpu.memory_space<vmem>>, vector<1x128xf32>
    %8 = arith.index_cast %c0_i32 : i32 to index
    %c0_4 = arith.constant 0 : index
    %c0_5 = arith.constant 0 : index
    %9 = vector.load %arg6[%8, %c0_4, %c0_5] : memref<8x8x128xf32, #tpu.memory_space<vmem>>, vector<1x1x128xf32>
    %10 = vector.shape_cast %9 : vector<1x1x128xf32> to vector<1x128xf32>
    %11 = vector.shape_cast %7 : vector<1x128xf32> to vector<1x1x128xf32>
    tpu.vector_store %arg6[%8, %c0_4, %c0_5], %11 {strides = array<i32>} : memref<8x8x128xf32, #tpu.memory_space<vmem>>, vector<1x1x128xf32>,
    %c2_i32_6 = arith.constant 2 : i32
    %12 = arith.muli %c0_i32, %c2_i32_6 : i32
    %c1_i32 = arith.constant 1 : i32
    %13 = arith.addi %12, %c1_i32 : i32
    %14 = arith.index_cast %13 : i32 to index
    %15 = memref.load %arg0[%14] : memref<16xi32, #tpu.memory_space<smem>>
    %16 = arith.index_cast %15 : i32 to index
    %c0_7 = arith.constant 0 : index
    %17 = vector.load %arg1[%16, %c0_7] : memref<56x128xf32, #tpu.memory_space<vmem>>, vector<1x128xf32>
    %18 = arith.index_cast %c0_i32 : i32 to index
    %c1 = arith.constant 1 : index
    %c0_8 = arith.constant 0 : index
    %19 = vector.load %arg6[%18, %c1, %c0_8] : memref<8x8x128xf32, #tpu.memory_space<vmem>>, vector<1x1x128xf32>
    %20 = vector.shape_cast %19 : vector<1x1x128xf32> to vector<1x128xf32>
    %21 = vector.shape_cast %17 : vector<1x128xf32> to vector<1x1x128xf32>
    tpu.vector_store %arg6[%18, %c1, %c0_8], %21 {strides = array<i32>} : memref<8x8x128xf32, #tpu.memory_space<vmem>>, vector<1x1x128xf32>,
    %c1_i32_9 = arith.constant 1 : i32
    %c2_i32_10 = arith.constant 2 : i32
    %22 = arith.muli %c1_i32_9, %c2_i32_10 : i32
    %c0_i32_11 = arith.constant 0 : i32
    %23 = arith.addi %22, %c0_i32_11 : i32
    %24 = arith.index_cast %23 : i32 to index
    %25 = memref.load %arg0[%24] : memref<16xi32, #tpu.memory_space<smem>>
    %26 = arith.index_cast %25 : i32 to index
    %c0_12 = arith.constant 0 : index
    %27 = vector.load %arg1[%26, %c0_12] : memref<56x128xf32, #tpu.memory_space<vmem>>, vector<1x128xf32>
    %28 = arith.index_cast %c1_i32_9 : i32 to index
    %c0_13 = arith.constant 0 : index
    %c0_14 = arith.constant 0 : index
    %29 = vector.load %arg6[%28, %c0_13, %c0_14] : memref<8x8x128xf32, #tpu.memory_space<vmem>>, vector<1x1x128xf32>
    %30 = vector.shape_cast %29 : vector<1x1x128xf32> to vector<1x128xf32>
    %31 = vector.shape_cast %27 : vector<1x128xf32> to vector<1x1x128xf32>
    tpu.vector_store %arg6[%28, %c0_13, %c0_14], %31 {strides = array<i32>} : memref<8x8x128xf32, #tpu.memory_space<vmem>>, vector<1x1x128xf32>,
    %c2_i32_15 = arith.constant 2 : i32
    %32 = arith.muli %c1_i32_9, %c2_i32_15 : i32
    %c1_i32_16 = arith.constant 1 : i32
    %33 = arith.addi %32, %c1_i32_16 : i32
    %34 = arith.index_cast %33 : i32 to index
    %35 = memref.load %arg0[%34] : memref<16xi32, #tpu.memory_space<smem>>
    %36 = arith.index_cast %35 : i32 to index
    %c0_17 = arith.constant 0 : index
    %37 = vector.load %arg1[%36, %c0_17] : memref<56x128xf32, #tpu.memory_space<vmem>>, vector<1x128xf32>
    %38 = arith.index_cast %c1_i32_9 : i32 to index
    %c1_18 = arith.constant 1 : index
    %c0_19 = arith.constant 0 : index
    %39 = vector.load %arg6[%38, %c1_18, %c0_19] : memref<8x8x128xf32, #tpu.memory_space<vmem>>, vector<1x1x128xf32>
    %40 = vector.shape_cast %39 : vector<1x1x128xf32> to vector<1x128xf32>
    %41 = vector.shape_cast %37 : vector<1x128xf32> to vector<1x1x128xf32>
    tpu.vector_store %arg6[%38, %c1_18, %c0_19], %41 {strides = array<i32>} : memref<8x8x128xf32, #tpu.memory_space<vmem>>, vector<1x1x128xf32>,
    %c2_i32_20 = arith.constant 2 : i32
    %c2_i32_21 = arith.constant 2 : i32
    %42 = arith.muli %c2_i32_20, %c2_i32_21 : i32
    %c0_i32_22 = arith.constant 0 : i32
    %43 = arith.addi %42, %c0_i32_22 : i32
    %44 = arith.index_cast %43 : i32 to index
    %45 = memref.load %arg0[%44] : memref<16xi32, #tpu.memory_space<smem>>
    %46 = arith.index_cast %45 : i32 to index
    %c0_23 = arith.constant 0 : index
    %47 = vector.load %arg1[%46, %c0_23] : memref<56x128xf32, #tpu.memory_space<vmem>>, vector<1x128xf32>
    %48 = arith.index_cast %c2_i32_20 : i32 to index
    %c0_24 = arith.constant 0 : index
    %c0_25 = arith.constant 0 : index
    %49 = vector.load %arg6[%48, %c0_24, %c0_25] : memref<8x8x128xf32, #tpu.memory_space<vmem>>, vector<1x1x128xf32>
    %50 = vector.shape_cast %49 : vector<1x1x128xf32> to vector<1x128xf32>
    %51 = vector.shape_cast %47 : vector<1x128xf32> to vector<1x1x128xf32>
    tpu.vector_store %arg6[%48, %c0_24, %c0_25], %51 {strides = array<i32>} : memref<8x8x128xf32, #tpu.memory_space<vmem>>, vector<1x1x128xf32>,
    %c2_i32_26 = arith.constant 2 : i32
    %52 = arith.muli %c2_i32_20, %c2_i32_26 : i32
    %c1_i32_27 = arith.constant 1 : i32
    %53 = arith.addi %52, %c1_i32_27 : i32
    %54 = arith.index_cast %53 : i32 to index
    %55 = memref.load %arg0[%54] : memref<16xi32, #tpu.memory_space<smem>>
    %56 = arith.index_cast %55 : i32 to index
    %c0_28 = arith.constant 0 : index
    %57 = vector.load %arg1[%56, %c0_28] : memref<56x128xf32, #tpu.memory_space<vmem>>, vector<1x128xf32>
    %58 = arith.index_cast %c2_i32_20 : i32 to index
    %c1_29 = arith.constant 1 : index
    %c0_30 = arith.constant 0 : index
    %59 = vector.load %arg6[%58, %c1_29, %c0_30] : memref<8x8x128xf32, #tpu.memory_space<vmem>>, vector<1x1x128xf32>
    %60 = vector.shape_cast %59 : vector<1x1x128xf32> to vector<1x128xf32>
    %61 = vector.shape_cast %57 : vector<1x128xf32> to vector<1x1x128xf32>
    tpu.vector_store %arg6[%58, %c1_29, %c0_30], %61 {strides = array<i32>} : memref<8x8x128xf32, #tpu.memory_space<vmem>>, vector<1x1x128xf32>,
    %c3_i32 = arith.constant 3 : i32
    %c2_i32_31 = arith.constant 2 : i32
    %62 = arith.muli %c3_i32, %c2_i32_31 : i32
    %c0_i32_32 = arith.constant 0 : i32
    %63 = arith.addi %62, %c0_i32_32 : i32
    %64 = arith.index_cast %63 : i32 to index
    %65 = memref.load %arg0[%64] : memref<16xi32, #tpu.memory_space<smem>>
    %66 = arith.index_cast %65 : i32 to index
    %c0_33 = arith.constant 0 : index
    %67 = vector.load %arg1[%66, %c0_33] : memref<56x128xf32, #tpu.memory_space<vmem>>, vector<1x128xf32>
    %68 = arith.index_cast %c3_i32 : i32 to index
    %c0_34 = arith.constant 0 : index
    %c0_35 = arith.constant 0 : index
    %69 = vector.load %arg6[%68, %c0_34, %c0_35] : memref<8x8x128xf32, #tpu.memory_space<vmem>>, vector<1x1x128xf32>
    %70 = vector.shape_cast %69 : vector<1x1x128xf32> to vector<1x128xf32>
    %71 = vector.shape_cast %67 : vector<1x128xf32> to vector<1x1x128xf32>
    tpu.vector_store %arg6[%68, %c0_34, %c0_35], %71 {strides = array<i32>} : memref<8x8x128xf32, #tpu.memory_space<vmem>>, vector<1x1x128xf32>,
    %c2_i32_36 = arith.constant 2 : i32
    %72 = arith.muli %c3_i32, %c2_i32_36 : i32
    %c1_i32_37 = arith.constant 1 : i32
    %73 = arith.addi %72, %c1_i32_37 : i32
    %74 = arith.index_cast %73 : i32 to index
    %75 = memref.load %arg0[%74] : memref<16xi32, #tpu.memory_space<smem>>
    %76 = arith.index_cast %75 : i32 to index
    %c0_38 = arith.constant 0 : index
    %77 = vector.load %arg1[%76, %c0_38] : memref<56x128xf32, #tpu.memory_space<vmem>>, vector<1x128xf32>
    %78 = arith.index_cast %c3_i32 : i32 to index
    %c1_39 = arith.constant 1 : index
    %c0_40 = arith.constant 0 : index
    %79 = vector.load %arg6[%78, %c1_39, %c0_40] : memref<8x8x128xf32, #tpu.memory_space<vmem>>, vector<1x1x128xf32>
    %80 = vector.shape_cast %79 : vector<1x1x128xf32> to vector<1x128xf32>
    %81 = vector.shape_cast %77 : vector<1x128xf32> to vector<1x1x128xf32>
    tpu.vector_store %arg6[%78, %c1_39, %c0_40], %81 {strides = array<i32>} : memref<8x8x128xf32, #tpu.memory_space<vmem>>, vector<1x1x128xf32>,
    %c4_i32 = arith.constant 4 : i32
    %c2_i32_41 = arith.constant 2 : i32
    %82 = arith.muli %c4_i32, %c2_i32_41 : i32
    %c0_i32_42 = arith.constant 0 : i32
    %83 = arith.addi %82, %c0_i32_42 : i32
    %84 = arith.index_cast %83 : i32 to index
    %85 = memref.load %arg0[%84] : memref<16xi32, #tpu.memory_space<smem>>
    %86 = arith.index_cast %85 : i32 to index
    %c0_43 = arith.constant 0 : index
    %87 = vector.load %arg1[%86, %c0_43] : memref<56x128xf32, #tpu.memory_space<vmem>>, vector<1x128xf32>
    %88 = arith.index_cast %c4_i32 : i32 to index
    %c0_44 = arith.constant 0 : index
    %c0_45 = arith.constant 0 : index
    %89 = vector.load %arg6[%88, %c0_44, %c0_45] : memref<8x8x128xf32, #tpu.memory_space<vmem>>, vector<1x1x128xf32>
    %90 = vector.shape_cast %89 : vector<1x1x128xf32> to vector<1x128xf32>
    %91 = vector.shape_cast %87 : vector<1x128xf32> to vector<1x1x128xf32>
    tpu.vector_store %arg6[%88, %c0_44, %c0_45], %91 {strides = array<i32>} : memref<8x8x128xf32, #tpu.memory_space<vmem>>, vector<1x1x128xf32>,
    %c2_i32_46 = arith.constant 2 : i32
    %92 = arith.muli %c4_i32, %c2_i32_46 : i32
    %c1_i32_47 = arith.constant 1 : i32
    %93 = arith.addi %92, %c1_i32_47 : i32
    %94 = arith.index_cast %93 : i32 to index
    %95 = memref.load %arg0[%94] : memref<16xi32, #tpu.memory_space<smem>>
    %96 = arith.index_cast %95 : i32 to index
    %c0_48 = arith.constant 0 : index
    %97 = vector.load %arg1[%96, %c0_48] : memref<56x128xf32, #tpu.memory_space<vmem>>, vector<1x128xf32>
    %98 = arith.index_cast %c4_i32 : i32 to index
    %c1_49 = arith.constant 1 : index
    %c0_50 = arith.constant 0 : index
    %99 = vector.load %arg6[%98, %c1_49, %c0_50] : memref<8x8x128xf32, #tpu.memory_space<vmem>>, vector<1x1x128xf32>
    %100 = vector.shape_cast %99 : vector<1x1x128xf32> to vector<1x128xf32>
    %101 = vector.shape_cast %97 : vector<1x128xf32> to vector<1x1x128xf32>
    tpu.vector_store %arg6[%98, %c1_49, %c0_50], %101 {strides = array<i32>} : memref<8x8x128xf32, #tpu.memory_space<vmem>>, vector<1x1x128xf32>,
    %c5_i32 = arith.constant 5 : i32
    %c2_i32_51 = arith.constant 2 : i32
    %102 = arith.muli %c5_i32, %c2_i32_51 : i32
    %c0_i32_52 = arith.constant 0 : i32
    %103 = arith.addi %102, %c0_i32_52 : i32
    %104 = arith.index_cast %103 : i32 to index
    %105 = memref.load %arg0[%104] : memref<16xi32, #tpu.memory_space<smem>>
    %106 = arith.index_cast %105 : i32 to index
    %c0_53 = arith.constant 0 : index
    %107 = vector.load %arg1[%106, %c0_53] : memref<56x128xf32, #tpu.memory_space<vmem>>, vector<1x128xf32>
    %108 = arith.index_cast %c5_i32 : i32 to index
    %c0_54 = arith.constant 0 : index
    %c0_55 = arith.constant 0 : index
    %109 = vector.load %arg6[%108, %c0_54, %c0_55] : memref<8x8x128xf32, #tpu.memory_space<vmem>>, vector<1x1x128xf32>
    %110 = vector.shape_cast %109 : vector<1x1x128xf32> to vector<1x128xf32>
    %111 = vector.shape_cast %107 : vector<1x128xf32> to vector<1x1x128xf32>
    tpu.vector_store %arg6[%108, %c0_54, %c0_55], %111 {strides = array<i32>} : memref<8x8x128xf32, #tpu.memory_space<vmem>>, vector<1x1x128xf32>,
    %c2_i32_56 = arith.constant 2 : i32
    %112 = arith.muli %c5_i32, %c2_i32_56 : i32
    %c1_i32_57 = arith.constant 1 : i32
    %113 = arith.addi %112, %c1_i32_57 : i32
    %114 = arith.index_cast %113 : i32 to index
    %115 = memref.load %arg0[%114] : memref<16xi32, #tpu.memory_space<smem>>
    %116 = arith.index_cast %115 : i32 to index
    %c0_58 = arith.constant 0 : index
    %117 = vector.load %arg1[%116, %c0_58] : memref<56x128xf32, #tpu.memory_space<vmem>>, vector<1x128xf32>
    %118 = arith.index_cast %c5_i32 : i32 to index
    %c1_59 = arith.constant 1 : index
    %c0_60 = arith.constant 0 : index
    %119 = vector.load %arg6[%118, %c1_59, %c0_60] : memref<8x8x128xf32, #tpu.memory_space<vmem>>, vector<1x1x128xf32>
    %120 = vector.shape_cast %119 : vector<1x1x128xf32> to vector<1x128xf32>
    %121 = vector.shape_cast %117 : vector<1x128xf32> to vector<1x1x128xf32>
    tpu.vector_store %arg6[%118, %c1_59, %c0_60], %121 {strides = array<i32>} : memref<8x8x128xf32, #tpu.memory_space<vmem>>, vector<1x1x128xf32>,
    %c6_i32 = arith.constant 6 : i32
    %c2_i32_61 = arith.constant 2 : i32
    %122 = arith.muli %c6_i32, %c2_i32_61 : i32
    %c0_i32_62 = arith.constant 0 : i32
    %123 = arith.addi %122, %c0_i32_62 : i32
    %124 = arith.index_cast %123 : i32 to index
    %125 = memref.load %arg0[%124] : memref<16xi32, #tpu.memory_space<smem>>
    %126 = arith.index_cast %125 : i32 to index
    %c0_63 = arith.constant 0 : index
    %127 = vector.load %arg1[%126, %c0_63] : memref<56x128xf32, #tpu.memory_space<vmem>>, vector<1x128xf32>
    %128 = arith.index_cast %c6_i32 : i32 to index
    %c0_64 = arith.constant 0 : index
    %c0_65 = arith.constant 0 : index
    %129 = vector.load %arg6[%128, %c0_64, %c0_65] : memref<8x8x128xf32, #tpu.memory_space<vmem>>, vector<1x1x128xf32>
    %130 = vector.shape_cast %129 : vector<1x1x128xf32> to vector<1x128xf32>
    %131 = vector.shape_cast %127 : vector<1x128xf32> to vector<1x1x128xf32>
    tpu.vector_store %arg6[%128, %c0_64, %c0_65], %131 {strides = array<i32>} : memref<8x8x128xf32, #tpu.memory_space<vmem>>, vector<1x1x128xf32>,
    %c2_i32_66 = arith.constant 2 : i32
    %132 = arith.muli %c6_i32, %c2_i32_66 : i32
    %c1_i32_67 = arith.constant 1 : i32
    %133 = arith.addi %132, %c1_i32_67 : i32
    %134 = arith.index_cast %133 : i32 to index
    %135 = memref.load %arg0[%134] : memref<16xi32, #tpu.memory_space<smem>>
    %136 = arith.index_cast %135 : i32 to index
    %c0_68 = arith.constant 0 : index
    %137 = vector.load %arg1[%136, %c0_68] : memref<56x128xf32, #tpu.memory_space<vmem>>, vector<1x128xf32>
    %138 = arith.index_cast %c6_i32 : i32 to index
    %c1_69 = arith.constant 1 : index
    %c0_70 = arith.constant 0 : index
    %139 = vector.load %arg6[%138, %c1_69, %c0_70] : memref<8x8x128xf32, #tpu.memory_space<vmem>>, vector<1x1x128xf32>
    %140 = vector.shape_cast %139 : vector<1x1x128xf32> to vector<1x128xf32>
    %141 = vector.shape_cast %137 : vector<1x128xf32> to vector<1x1x128xf32>
    tpu.vector_store %arg6[%138, %c1_69, %c0_70], %141 {strides = array<i32>} : memref<8x8x128xf32, #tpu.memory_space<vmem>>, vector<1x1x128xf32>,
    %c7_i32 = arith.constant 7 : i32
    %c2_i32_71 = arith.constant 2 : i32
    %142 = arith.muli %c7_i32, %c2_i32_71 : i32
    %c0_i32_72 = arith.constant 0 : i32
    %143 = arith.addi %142, %c0_i32_72 : i32
    %144 = arith.index_cast %143 : i32 to index
    %145 = memref.load %arg0[%144] : memref<16xi32, #tpu.memory_space<smem>>
    %146 = arith.index_cast %145 : i32 to index
    %c0_73 = arith.constant 0 : index
    %147 = vector.load %arg1[%146, %c0_73] : memref<56x128xf32, #tpu.memory_space<vmem>>, vector<1x128xf32>
    %148 = arith.index_cast %c7_i32 : i32 to index
    %c0_74 = arith.constant 0 : index
    %c0_75 = arith.constant 0 : index
    %149 = vector.load %arg6[%148, %c0_74, %c0_75] : memref<8x8x128xf32, #tpu.memory_space<vmem>>, vector<1x1x128xf32>
    %150 = vector.shape_cast %149 : vector<1x1x128xf32> to vector<1x128xf32>
    %151 = vector.shape_cast %147 : vector<1x128xf32> to vector<1x1x128xf32>
    tpu.vector_store %arg6[%148, %c0_74, %c0_75], %151 {strides = array<i32>} : memref<8x8x128xf32, #tpu.memory_space<vmem>>, vector<1x1x128xf32>,
    %c2_i32_76 = arith.constant 2 : i32
    %152 = arith.muli %c7_i32, %c2_i32_76 : i32
    %c1_i32_77 = arith.constant 1 : i32
    %153 = arith.addi %152, %c1_i32_77 : i32
    %154 = arith.index_cast %153 : i32 to index
    %155 = memref.load %arg0[%154] : memref<16xi32, #tpu.memory_space<smem>>
    %156 = arith.index_cast %155 : i32 to index
    %c0_78 = arith.constant 0 : index
    %157 = vector.load %arg1[%156, %c0_78] : memref<56x128xf32, #tpu.memory_space<vmem>>, vector<1x128xf32>
    %158 = arith.index_cast %c7_i32 : i32 to index
    %c1_79 = arith.constant 1 : index
    %c0_80 = arith.constant 0 : index
    %159 = vector.load %arg6[%158, %c1_79, %c0_80] : memref<8x8x128xf32, #tpu.memory_space<vmem>>, vector<1x1x128xf32>
    %160 = vector.shape_cast %159 : vector<1x1x128xf32> to vector<1x128xf32>
    %161 = vector.shape_cast %157 : vector<1x128xf32> to vector<1x1x128xf32>
    tpu.vector_store %arg6[%158, %c1_79, %c0_80], %161 {strides = array<i32>} : memref<8x8x128xf32, #tpu.memory_space<vmem>>, vector<1x1x128xf32>,
    %c8_i32 = arith.constant 8 : i32
    %cst_81 = arith.constant 0.000000e+00 : f32
    %162 = vector.broadcast %cst_81 : f32 to vector<8x128xf32>
    %c0_i32_82 = arith.constant 0 : i32
    %163 = arith.index_cast %c0_i32_82 : i32 to index
    %c0_83 = arith.constant 0 : index
    %c0_84 = arith.constant 0 : index
    %164 = vector.load %arg6[%163, %c0_83, %c0_84] : memref<8x8x128xf32, #tpu.memory_space<vmem>>, vector<1x8x128xf32>
    %165 = vector.shape_cast %164 : vector<1x8x128xf32> to vector<8x128xf32>
    %c0_85 = arith.constant 0 : index
    %c0_86 = arith.constant 0 : index
    %166 = vector.load %arg2[%c0_85, %c0_86] : memref<128x128xf32, #tpu.memory_space<vmem>>, vector<128x128xf32>
    %cst_87 = arith.constant dense<0.000000e+00> : vector<8x128xf32>
    %167 = tpu.matmul %162, %166, %cst_87 {dimension_numbers = #tpu.dot_dimension_numbers<[1], [0], [0], [1], [0, 0, 1, 1], [], []>} : vector<8x128xf32>, vector<128x128xf32>, vector<8x128xf32> -> vector<8x128xf32>
    %168 = arith.addf %165, %167 : vector<8x128xf32>
    %169 = math.tanh %168 : vector<8x128xf32>
    %c1_i32_88 = arith.constant 1 : i32
    %170 = arith.index_cast %c1_i32_88 : i32 to index
    %c0_89 = arith.constant 0 : index
    %c0_90 = arith.constant 0 : index
    %171 = vector.load %arg6[%170, %c0_89, %c0_90] : memref<8x8x128xf32, #tpu.memory_space<vmem>>, vector<1x8x128xf32>
    %172 = vector.shape_cast %171 : vector<1x8x128xf32> to vector<8x128xf32>
    %c0_91 = arith.constant 0 : index
    %c0_92 = arith.constant 0 : index
    %173 = vector.load %arg2[%c0_91, %c0_92] : memref<128x128xf32, #tpu.memory_space<vmem>>, vector<128x128xf32>
    %cst_93 = arith.constant dense<0.000000e+00> : vector<8x128xf32>
    %174 = tpu.matmul %169, %173, %cst_93 {dimension_numbers = #tpu.dot_dimension_numbers<[1], [0], [0], [1], [0, 0, 1, 1], [], []>} : vector<8x128xf32>, vector<128x128xf32>, vector<8x128xf32> -> vector<8x128xf32>
    %175 = arith.addf %172, %174 : vector<8x128xf32>
    %176 = math.tanh %175 : vector<8x128xf32>
    %c2_i32_94 = arith.constant 2 : i32
    %177 = arith.index_cast %c2_i32_94 : i32 to index
    %c0_95 = arith.constant 0 : index
    %c0_96 = arith.constant 0 : index
    %178 = vector.load %arg6[%177, %c0_95, %c0_96] : memref<8x8x128xf32, #tpu.memory_space<vmem>>, vector<1x8x128xf32>
    %179 = vector.shape_cast %178 : vector<1x8x128xf32> to vector<8x128xf32>
    %c0_97 = arith.constant 0 : index
    %c0_98 = arith.constant 0 : index
    %180 = vector.load %arg2[%c0_97, %c0_98] : memref<128x128xf32, #tpu.memory_space<vmem>>, vector<128x128xf32>
    %cst_99 = arith.constant dense<0.000000e+00> : vector<8x128xf32>
    %181 = tpu.matmul %176, %180, %cst_99 {dimension_numbers = #tpu.dot_dimension_numbers<[1], [0], [0], [1], [0, 0, 1, 1], [], []>} : vector<8x128xf32>, vector<128x128xf32>, vector<8x128xf32> -> vector<8x128xf32>
    %182 = arith.addf %179, %181 : vector<8x128xf32>
    %183 = math.tanh %182 : vector<8x128xf32>
    %c3_i32_100 = arith.constant 3 : i32
    %184 = arith.index_cast %c3_i32_100 : i32 to index
    %c0_101 = arith.constant 0 : index
    %c0_102 = arith.constant 0 : index
    %185 = vector.load %arg6[%184, %c0_101, %c0_102] : memref<8x8x128xf32, #tpu.memory_space<vmem>>, vector<1x8x128xf32>
    %186 = vector.shape_cast %185 : vector<1x8x128xf32> to vector<8x128xf32>
    %c0_103 = arith.constant 0 : index
    %c0_104 = arith.constant 0 : index
    %187 = vector.load %arg2[%c0_103, %c0_104] : memref<128x128xf32, #tpu.memory_space<vmem>>, vector<128x128xf32>
    %cst_105 = arith.constant dense<0.000000e+00> : vector<8x128xf32>
    %188 = tpu.matmul %183, %187, %cst_105 {dimension_numbers = #tpu.dot_dimension_numbers<[1], [0], [0], [1], [0, 0, 1, 1], [], []>} : vector<8x128xf32>, vector<128x128xf32>, vector<8x128xf32> -> vector<8x128xf32>
    %189 = arith.addf %186, %188 : vector<8x128xf32>
    %190 = math.tanh %189 : vector<8x128xf32>
    %c4_i32_106 = arith.constant 4 : i32
    %191 = arith.index_cast %c4_i32_106 : i32 to index
    %c0_107 = arith.constant 0 : index
    %c0_108 = arith.constant 0 : index
    %192 = vector.load %arg6[%191, %c0_107, %c0_108] : memref<8x8x128xf32, #tpu.memory_space<vmem>>, vector<1x8x128xf32>
    %193 = vector.shape_cast %192 : vector<1x8x128xf32> to vector<8x128xf32>
    %c0_109 = arith.constant 0 : index
    %c0_110 = arith.constant 0 : index
    %194 = vector.load %arg2[%c0_109, %c0_110] : memref<128x128xf32, #tpu.memory_space<vmem>>, vector<128x128xf32>
    %cst_111 = arith.constant dense<0.000000e+00> : vector<8x128xf32>
    %195 = tpu.matmul %190, %194, %cst_111 {dimension_numbers = #tpu.dot_dimension_numbers<[1], [0], [0], [1], [0, 0, 1, 1], [], []>} : vector<8x128xf32>, vector<128x128xf32>, vector<8x128xf32> -> vector<8x128xf32>
    %196 = arith.addf %193, %195 : vector<8x128xf32>
    %197 = math.tanh %196 : vector<8x128xf32>
    %c5_i32_112 = arith.constant 5 : i32
    %198 = arith.index_cast %c5_i32_112 : i32 to index
    %c0_113 = arith.constant 0 : index
    %c0_114 = arith.constant 0 : index
    %199 = vector.load %arg6[%198, %c0_113, %c0_114] : memref<8x8x128xf32, #tpu.memory_space<vmem>>, vector<1x8x128xf32>
    %200 = vector.shape_cast %199 : vector<1x8x128xf32> to vector<8x128xf32>
    %c0_115 = arith.constant 0 : index
    %c0_116 = arith.constant 0 : index
    %201 = vector.load %arg2[%c0_115, %c0_116] : memref<128x128xf32, #tpu.memory_space<vmem>>, vector<128x128xf32>
    %cst_117 = arith.constant dense<0.000000e+00> : vector<8x128xf32>
    %202 = tpu.matmul %197, %201, %cst_117 {dimension_numbers = #tpu.dot_dimension_numbers<[1], [0], [0], [1], [0, 0, 1, 1], [], []>} : vector<8x128xf32>, vector<128x128xf32>, vector<8x128xf32> -> vector<8x128xf32>
    %203 = arith.addf %200, %202 : vector<8x128xf32>
    %204 = math.tanh %203 : vector<8x128xf32>
    %c6_i32_118 = arith.constant 6 : i32
    %205 = arith.index_cast %c6_i32_118 : i32 to index
    %c0_119 = arith.constant 0 : index
    %c0_120 = arith.constant 0 : index
    %206 = vector.load %arg6[%205, %c0_119, %c0_120] : memref<8x8x128xf32, #tpu.memory_space<vmem>>, vector<1x8x128xf32>
    %207 = vector.shape_cast %206 : vector<1x8x128xf32> to vector<8x128xf32>
    %c0_121 = arith.constant 0 : index
    %c0_122 = arith.constant 0 : index
    %208 = vector.load %arg2[%c0_121, %c0_122] : memref<128x128xf32, #tpu.memory_space<vmem>>, vector<128x128xf32>
    %cst_123 = arith.constant dense<0.000000e+00> : vector<8x128xf32>
    %209 = tpu.matmul %204, %208, %cst_123 {dimension_numbers = #tpu.dot_dimension_numbers<[1], [0], [0], [1], [0, 0, 1, 1], [], []>} : vector<8x128xf32>, vector<128x128xf32>, vector<8x128xf32> -> vector<8x128xf32>
    %210 = arith.addf %207, %209 : vector<8x128xf32>
    %211 = math.tanh %210 : vector<8x128xf32>
    %c7_i32_124 = arith.constant 7 : i32
    %212 = arith.index_cast %c7_i32_124 : i32 to index
    %c0_125 = arith.constant 0 : index
    %c0_126 = arith.constant 0 : index
    %213 = vector.load %arg6[%212, %c0_125, %c0_126] : memref<8x8x128xf32, #tpu.memory_space<vmem>>, vector<1x8x128xf32>
    %214 = vector.shape_cast %213 : vector<1x8x128xf32> to vector<8x128xf32>
    %c0_127 = arith.constant 0 : index
    %c0_128 = arith.constant 0 : index
    %215 = vector.load %arg2[%c0_127, %c0_128] : memref<128x128xf32, #tpu.memory_space<vmem>>, vector<128x128xf32>
    %cst_129 = arith.constant dense<0.000000e+00> : vector<8x128xf32>
    %216 = tpu.matmul %211, %215, %cst_129 {dimension_numbers = #tpu.dot_dimension_numbers<[1], [0], [0], [1], [0, 0, 1, 1], [], []>} : vector<8x128xf32>, vector<128x128xf32>, vector<8x128xf32> -> vector<8x128xf32>
    %217 = arith.addf %214, %216 : vector<8x128xf32>
    %218 = math.tanh %217 : vector<8x128xf32>
    %c8_i32_130 = arith.constant 8 : i32
    %c0_131 = arith.constant 0 : index
    %c0_132 = arith.constant 0 : index
    %219 = vector.load %arg3[%c0_131, %c0_132] : memref<128x128xf32, #tpu.memory_space<vmem>>, vector<128x128xf32>
    %cst_133 = arith.constant dense<0.000000e+00> : vector<8x128xf32>
    %220 = tpu.matmul %218, %219, %cst_133 {dimension_numbers = #tpu.dot_dimension_numbers<[1], [0], [0], [1], [0, 0, 1, 1], [], []>} : vector<8x128xf32>, vector<128x128xf32>, vector<8x128xf32> -> vector<8x128xf32>
    %c0_134 = arith.constant 0 : index
    %c0_135 = arith.constant 0 : index
    %221 = vector.load %arg4[%c0_134, %c0_135] : memref<1x128xf32, #tpu.memory_space<vmem>>, vector<1x128xf32>
    %222 = vector.broadcast %221 : vector<1x128xf32> to vector<8x128xf32>
    %223 = arith.addf %220, %222 : vector<8x128xf32>
    %c0_136 = arith.constant 0 : index
    %c0_137 = arith.constant 0 : index
    %224 = vector.load %arg5[%c0_136, %c0_137] : memref<8x128xf32, #tpu.memory_space<vmem>>, vector<8x128xf32>
    tpu.vector_store %arg5[%c0_136, %c0_137], %223 {strides = array<i32>} : memref<8x128xf32, #tpu.memory_space<vmem>>, vector<8x128xf32>,
    return
  }
}

</mosaic_0001>

<llo_original>
// kernel: tpu_custom_call.1
$region0: #{tpu_custom_call.1}
  #allocation0 [shape = 'u32[]', space=smem, size = 0x4, offset = 0x4, fixed_abs, tag = 'smem constant byte address 0x4 - core index']
  #allocation1 [shape = 'u32[144,128]{1,0:T(1,128)}', space=vmem, size = 0x12000, scoped, tag = 'internal scratch']
  #allocation2 [shape = 'f32[8,8,128]{2,1,0:T(8,128)}', space=vmem, size = 0x8000, scoped, tag = 'scratch operand']
  %s0 = inlined_call_operand.hbm [shape: s32[16], index: 0, kind: input, shape index: {}]
  %s1 = inlined_call_operand.hbm [shape: f32[56,128], index: 1, kind: input, shape index: {}]
  %s2 = inlined_call_operand.hbm [shape: f32[128,128], index: 2, kind: input, shape index: {}]
  %s3 = inlined_call_operand.hbm [shape: f32[128,128], index: 3, kind: input, shape index: {}]
  %s4 = inlined_call_operand.vmem [shape: f32[1,128], index: 4, kind: input, shape index: {}]
  %s5 = inlined_call_operand.hbm [shape: f32[8,128], index: 5, kind: output, shape index: {}]
  %s6 = sld [smem:[#allocation0]]
  $region46: #{tpu_custom_call.1} parent=0
    _
  %s8 = ssub.s32 1, %s6
  %s9 = scalar_select 0, %s8, %s6
  $region1: #{tpu_custom_call.1} parent=0
    #allocation3 [shape = 'u8[512]{0}', space=smem, size = 0x200, scoped, tag = 'input window, operand 0, single buffered']
    #allocation4 [shape = 's32[1]{0}', space=sflag, size = 0x4, scoped, tag = 'scoped memory for tpu_custom_call.1']
    #allocation5 [shape = 's32[1]{0}', space=sflag, size = 0x4, scoped, tag = 'scoped memory for tpu_custom_call.1']
    #allocation6 [shape = 's32[1]{0}', space=sflag, size = 0x4, scoped, tag = 'scoped memory for tpu_custom_call.1']
    #allocation7 [shape = 'u8[28672]{0}', space=vmem, size = 0x7000, scoped, tag = 'input window, operand 1, single buffered']
    #allocation8 [shape = 'u8[65536]{0}', space=vmem, size = 0x10000, scoped, tag = 'input window, operand 2, single buffered']
    #allocation9 [shape = 's32[1]{0}', space=sflag, size = 0x4, scoped, tag = 'scoped memory for tpu_custom_call.1']
    #allocation10 [shape = 'u8[65536]{0}', space=vmem, size = 0x10000, scoped, tag = 'input window, operand 3, single buffered']
    #allocation11 [shape = 'u8[4096]{0}', space=vmem, size = 0x1000, scoped, tag = 'output window, operand 0, single buffered']
    %10 = vsyncpa [#allocation6], 0
    %11 = vsyncpa [#allocation4], 0
    %12 = vsyncpa [#allocation9], 0
    %13 = vsyncpa [#allocation5], 0
    // Predicated region
    $region2: #{tpu_custom_call.1} parent=1 // pred_check
      _
    $region3: #{tpu_custom_call.1} parent=1 // pred_check_branch
      %15 = sbr.rel (0) target = $region5
    $region4: #{tpu_custom_call.1} parent=1 // pred_region
      %s17 = ssub.s32 16, 16
      %18 = vsyncadd [#allocation6], %s17
      %21 = dma.hbm_to_smem %s0, 16, [#allocation3], [#allocation6]
    $region5: #{tpu_custom_call.1} parent=1 // pred_fallthru
      _
    // Predicated region
    $region6: #{tpu_custom_call.1} parent=1 // pred_check
      _
    $region7: #{tpu_custom_call.1} parent=1 // pred_check_branch
      %23 = sbr.rel (0) target = $region9
    $region8: #{tpu_custom_call.1} parent=1 // pred_region
      %s25 = ssub.s32 896, 896
      %26 = vsyncadd [#allocation4], %s25
      %s27 = sshll.u32 [#allocation7], 4
      %s28 = int_to_ptr.vmem [resolvable:$true] %s27
      %33 = dma.hbm_to_vmem [thread:$0]  %s1, 896, %s28, [#allocation4], 128, 128, 8
    $region9: #{tpu_custom_call.1} parent=1 // pred_fallthru
      _
    // Predicated region
    $region10: #{tpu_custom_call.1} parent=1 // pred_check
      _
    $region11: #{tpu_custom_call.1} parent=1 // pred_check_branch
      %35 = sbr.rel (0) target = $region13
    $region12: #{tpu_custom_call.1} parent=1 // pred_region
      %s37 = ssub.s32 2048, 2048
      %38 = vsyncadd [#allocation9], %s37
      %s39 = sshll.u32 [#allocation8], 4
      %s40 = int_to_ptr.vmem [resolvable:$true] %s39
      %45 = dma.hbm_to_vmem [thread:$0]  %s2, 2048, %s40, [#allocation9], 128, 128, 8
    $region13: #{tpu_custom_call.1} parent=1 // pred_fallthru
      _
    // Predicated region
    $region14: #{tpu_custom_call.1} parent=1 // pred_check
      _
    $region15: #{tpu_custom_call.1} parent=1 // pred_check_branch
      %47 = sbr.rel (0) target = $region17
    $region16: #{tpu_custom_call.1} parent=1 // pred_region
      %s49 = ssub.s32 2048, 2048
      %50 = vsyncadd [#allocation9], %s49
      %s51 = sshll.u32 [#allocation10], 4
      %s52 = int_to_ptr.vmem [resolvable:$true] %s51
      %57 = dma.hbm_to_vmem [thread:$0]  %s3, 2048, %s52, [#allocation9], 128, 128, 8
    $region17: #{tpu_custom_call.1} parent=1 // pred_fallthru
      _
    // Predicated region
    $region18: #{tpu_custom_call.1} parent=1 // pred_check
      _
    $region19: #{tpu_custom_call.1} parent=1 // pred_check_branch
      %59 = sbr.rel (0) target = $region21
    $region20: #{tpu_custom_call.1} parent=1 // pred_region
      _
    $region21: #{tpu_custom_call.1} parent=1 // pred_fallthru
      _
    // Predicated region
    $region22: #{tpu_custom_call.1} parent=1 // pred_check
      _
    $region23: #{tpu_custom_call.1} parent=1 // pred_check_branch
      %61 = sbr.rel (0) target = $region25
    $region24: #{tpu_custom_call.1} parent=1 // pred_region
      %62 = dma.done [#allocation6], 16
    $region25: #{tpu_custom_call.1} parent=1 // pred_fallthru
      _
    // Predicated region
    $region26: #{tpu_custom_call.1} parent=1 // pred_check
      _
    $region27: #{tpu_custom_call.1} parent=1 // pred_check_branch
      %64 = sbr.rel (0) target = $region29
    $region28: #{tpu_custom_call.1} parent=1 // pred_region
      %65 = dma.done [#allocation4], 896
    $region29: #{tpu_custom_call.1} parent=1 // pred_fallthru
      _
    // Predicated region
    $region30: #{tpu_custom_call.1} parent=1 // pred_check
      _
    $region31: #{tpu_custom_call.1} parent=1 // pred_check_branch
      %67 = sbr.rel (0) target = $region33
    $region32: #{tpu_custom_call.1} parent=1 // pred_region
      %68 = dma.done [#allocation9], 2048
    $region33: #{tpu_custom_call.1} parent=1 // pred_fallthru
      _
    // Predicated region
    $region34: #{tpu_custom_call.1} parent=1 // pred_check
      _
    $region35: #{tpu_custom_call.1} parent=1 // pred_check_branch
      %70 = sbr.rel (0) target = $region37
    $region36: #{tpu_custom_call.1} parent=1 // pred_region
      %71 = dma.done [#allocation9], 2048
    $region37: #{tpu_custom_call.1} parent=1 // pred_fallthru
      _
    %72 = sfence
    %73 = vst [vmem:[#allocation2] sm:$0xff] 0.0
    %74 = vst [vmem:[#allocation2 + $0x8] sm:$0xff] 0.0
    %75 = vst [vmem:[#allocation2 + $0x10] sm:$0xff] 0.0
    %76 = vst [vmem:[#allocation2 + $0x18] sm:$0xff] 0.0
    %77 = vst [vmem:[#allocation2 + $0x20] sm:$0xff] 0.0
    %78 = vst [vmem:[#allocation2 + $0x28] sm:$0xff] 0.0
    %79 = vst [vmem:[#allocation2 + $0x30] sm:$0xff] 0.0
    %80 = vst [vmem:[#allocation2 + $0x38] sm:$0xff] 0.0
    %s81 = sld [smem:[#allocation3]]
    %s82 = scalar_lea.vmem [#allocation7], %s81
    %v83 = vld [vmem:[%s82] sm:$0x1]
    %84 = vst [vmem:[#allocation2] sm:$0x1] %v83
    %s85 = sld [smem:[#allocation3 + $0x1]]
    %s86 = scalar_lea.vmem [#allocation7], %s85
    %v87 = vld [vmem:[%s86] sm:$0x1]
    %88 = vst [vmem:[#allocation2 + $0x1] sm:$0x1] %v87
    %s89 = sld [smem:[#allocation3 + $0x2]]
    %s90 = scalar_lea.vmem [#allocation7], %s89
    %v91 = vld [vmem:[%s90] sm:$0x1]
    %s92 = scalar_lea.vmem [#allocation2], 8
    %93 = vst [vmem:[%s92] sm:$0x1] %v91
    %s94 = sld [smem:[#allocation3 + $0x3]]
    %s95 = scalar_lea.vmem [#allocation7], %s94
    %v96 = vld [vmem:[%s95] sm:$0x1]
    %97 = vst [vmem:[%s92 + $0x1] sm:$0x1] %v96
    %s98 = sld [smem:[#allocation3 + $0x4]]
    %s99 = scalar_lea.vmem [#allocation7], %s98
    %v100 = vld [vmem:[%s99] sm:$0x1]
    %s101 = scalar_lea.vmem [#allocation2], 16
    %102 = vst [vmem:[%s101] sm:$0x1] %v100
    %s103 = sld [smem:[#allocation3 + $0x5]]
    %s104 = scalar_lea.vmem [#allocation7], %s103
    %v105 = vld [vmem:[%s104] sm:$0x1]
    %106 = vst [vmem:[%s101 + $0x1] sm:$0x1] %v105
    %s107 = sld [smem:[#allocation3 + $0x6]]
    %s108 = scalar_lea.vmem [#allocation7], %s107
    %v109 = vld [vmem:[%s108] sm:$0x1]
    %s110 = scalar_lea.vmem [#allocation2], 24
    %111 = vst [vmem:[%s110] sm:$0x1] %v109
    %s112 = sld [smem:[#allocation3 + $0x7]]
    %s113 = scalar_lea.vmem [#allocation7], %s112
    %v114 = vld [vmem:[%s113] sm:$0x1]
    %115 = vst [vmem:[%s110 + $0x1] sm:$0x1] %v114
    %s116 = sld [smem:[#allocation3 + $0x8]]
    %s117 = scalar_lea.vmem [#allocation7], %s116
    %v118 = vld [vmem:[%s117] sm:$0x1]
    %s119 = scalar_lea.vmem [#allocation2], 32
    %120 = vst [vmem:[%s119] sm:$0x1] %v118
    %s121 = sld [smem:[#allocation3 + $0x9]]
    %s122 = scalar_lea.vmem [#allocation7], %s121
    %v123 = vld [vmem:[%s122] sm:$0x1]
    %124 = vst [vmem:[%s119 + $0x1] sm:$0x1] %v123
    %s125 = sld [smem:[#allocation3 + $0xa]]
    %s126 = scalar_lea.vmem [#allocation7], %s125
    %v127 = vld [vmem:[%s126] sm:$0x1]
    %s128 = scalar_lea.vmem [#allocation2], 40
    %129 = vst [vmem:[%s128] sm:$0x1] %v127
    %s130 = sld [smem:[#allocation3 + $0xb]]
    %s131 = scalar_lea.vmem [#allocation7], %s130
    %v132 = vld [vmem:[%s131] sm:$0x1]
    %133 = vst [vmem:[%s128 + $0x1] sm:$0x1] %v132
    %s134 = sld [smem:[#allocation3 + $0xc]]
    %s135 = scalar_lea.vmem [#allocation7], %s134
    %v136 = vld [vmem:[%s135] sm:$0x1]
    %s137 = scalar_lea.vmem [#allocation2], 48
    %138 = vst [vmem:[%s137] sm:$0x1] %v136
    %s139 = sld [smem:[#allocation3 + $0xd]]
    %s140 = scalar_lea.vmem [#allocation7], %s139
    %v141 = vld [vmem:[%s140] sm:$0x1]
    %142 = vst [vmem:[%s137 + $0x1] sm:$0x1] %v141
    %s143 = sld [smem:[#allocation3 + $0xe]]
    %s144 = scalar_lea.vmem [#allocation7], %s143
    %v145 = vld [vmem:[%s144] sm:$0x1]
    %s146 = scalar_lea.vmem [#allocation2], 56
    %147 = vst [vmem:[%s146] sm:$0x1] %v145
    %s148 = sld [smem:[#allocation3 + $0xf]]
    %s149 = scalar_lea.vmem [#allocation7], %s148
    %v150 = vld [vmem:[%s149] sm:$0x1]
    %151 = vst [vmem:[%s146 + $0x1] sm:$0x1] %v150
    %v152 = vld [vmem:[#allocation2] sm:$0xff]
    %v153 = vld [vmem:[#allocation8] sm:$0xff]
    %v154 = vld [vmem:[#allocation8 + $0x8] sm:$0xff]
    %v155 = vld [vmem:[#allocation8 + $0x10] sm:$0xff]
    %v156 = vld [vmem:[#allocation8 + $0x18] sm:$0xff]
    %v157 = vld [vmem:[#allocation8 + $0x20] sm:$0xff]
    %v158 = vld [vmem:[#allocation8 + $0x28] sm:$0xff]
    %v159 = vld [vmem:[#allocation8 + $0x30] sm:$0xff]
    %v160 = vld [vmem:[#allocation8 + $0x38] sm:$0xff]
    %v161 = vld [vmem:[#allocation8 + $0x40] sm:$0xff]
    %v162 = vld [vmem:[#allocation8 + $0x48] sm:$0xff]
    %v163 = vld [vmem:[#allocation8 + $0x50] sm:$0xff]
    %v164 = vld [vmem:[#allocation8 + $0x58] sm:$0xff]
    %v165 = vld [vmem:[#allocation8 + $0x60] sm:$0xff]
    %v166 = vld [vmem:[#allocation8 + $0x68] sm:$0xff]
    %v167 = vld [vmem:[#allocation8 + $0x70] sm:$0xff]
    %v168 = vld [vmem:[#allocation8 + $0x78] sm:$0xff]
    %169 = vmatprep.subr.mxu0 0.0
    %170 = vmatpush1.msra.mxu0 %v153
    %171 = vmatprep.subr.mxu0 0.0
    %172 = vmatpush1.msra.mxu0 %v154
    %173 = vmatprep.subr.mxu0 0.0
    %174 = vmatpush1.msra.mxu0 %v155
    %175 = vmatprep.subr.mxu0 0.0
    %176 = vmatpush1.msra.mxu0 %v156
    %177 = vmatprep.subr.mxu0 0.0
    %178 = vmatpush1.msra.mxu0 %v157
    %179 = vmatprep.subr.mxu0 0.0
    %180 = vmatpush1.msra.mxu0 %v158
    %181 = vmatprep.subr.mxu0 0.0
    %182 = vmatpush1.msra.mxu0 %v159
    %183 = vmatprep.subr.mxu0 0.0
    %184 = vmatpush1.msra.mxu0 %v160
    %185 = vmatprep.subr.mxu0 0.0
    %186 = vmatpush1.msra.mxu0 %v161
    %187 = vmatprep.subr.mxu0 0.0
    %188 = vmatpush1.msra.mxu0 %v162
    %189 = vmatprep.subr.mxu0 0.0
    %190 = vmatpush1.msra.mxu0 %v163
    %191 = vmatprep.subr.mxu0 0.0
    %192 = vmatpush1.msra.mxu0 %v164
    %193 = vmatprep.subr.mxu0 0.0
    %194 = vmatpush1.msra.mxu0 %v165
    %195 = vmatprep.subr.mxu0 0.0
    %196 = vmatpush1.msra.mxu0 %v166
    %197 = vmatprep.subr.mxu0 0.0
    %198 = vmatpush1.msra.mxu0 %v167
    %199 = vmatprep.subr.mxu0 0.0
    %200 = vmatpush1.msra.mxu0 %v168
    %201 = vmatprep.subr.mxu0 0.0
    %202 = vmatpush1.msra.mxu0 0.0
    %203 = vmatprep.subr.mxu0 0.0
    %204 = vmatpush1.msra.mxu0 0.0
    %205 = vmatprep.subr.mxu0 0.0
    %206 = vmatpush1.msra.mxu0 0.0
    %207 = vmatprep.subr.mxu0 0.0
    %208 = vmatpush1.msra.mxu0 0.0
    %209 = vmatprep.subr.mxu0 0.0
    %210 = vmatpush1.msra.mxu0 0.0
    %211 = vmatprep.subr.mxu0 0.0
    %212 = vmatpush1.msra.mxu0 0.0
    %213 = vmatprep.subr.mxu0 0.0
    %214 = vmatpush1.msra.mxu0 0.0
    %215 = vmatprep.subr.mxu0 0.0
    %216 = vmatpush1.msra.mxu0 0.0
    %217 = vmatprep.subr.mxu0 0.0
    %218 = vmatpush1.msra.mxu0 0.0
    %219 = vmatprep.subr.mxu0 0.0
    %220 = vmatpush1.msra.mxu0 0.0
    %221 = vmatprep.subr.mxu0 0.0
    %222 = vmatpush1.msra.mxu0 0.0
    %223 = vmatprep.subr.mxu0 0.0
    %224 = vmatpush1.msra.mxu0 0.0
    %225 = vmatprep.subr.mxu0 0.0
    %226 = vmatpush1.msra.mxu0 0.0
    %227 = vmatprep.subr.mxu0 0.0
    %228 = vmatpush1.msra.mxu0 0.0
    %229 = vmatprep.subr.mxu0 0.0
    %230 = vmatpush1.msra.mxu0 0.0
    %231 = vmatprep.subr.mxu0 0.0
    %232 = vmatpush1.msra.mxu0 0.0
    %233 = vmatprep.mubr.f32.mxu0 0.0
    %234 = vmatmul.mubr.f32.gmra.mrb[0].mxu0 0.0
    %v235 = vpop.f32.mrb[0].mxu0
    %v236 = vadd.f32 0.0, %v235
    %v237 = vpop.f32.mrb[0].mxu0
    %238 = vdwg.mxu0
    %v239 = vadd.f32 %v152, %v236
    %v240 = vtanh.pop %v239
    %v241 = vld [vmem:[%s92] sm:$0xff]
    %242 = vmatprep.subr.mxu0 0.0
    %243 = vmatpush1.msra.mxu0 %v153
    %244 = vmatprep.subr.mxu0 0.0
    %245 = vmatpush1.msra.mxu0 %v154
    %246 = vmatprep.subr.mxu0 0.0
    %247 = vmatpush1.msra.mxu0 %v155
    %248 = vmatprep.subr.mxu0 0.0
    %249 = vmatpush1.msra.mxu0 %v156
    %250 = vmatprep.subr.mxu0 0.0
    %251 = vmatpush1.msra.mxu0 %v157
    %252 = vmatprep.subr.mxu0 0.0
    %253 = vmatpush1.msra.mxu0 %v158
    %254 = vmatprep.subr.mxu0 0.0
    %255 = vmatpush1.msra.mxu0 %v159
    %256 = vmatprep.subr.mxu0 0.0
    %257 = vmatpush1.msra.mxu0 %v160
    %258 = vmatprep.subr.mxu0 0.0
    %259 = vmatpush1.msra.mxu0 %v161
    %260 = vmatprep.subr.mxu0 0.0
    %261 = vmatpush1.msra.mxu0 %v162
    %262 = vmatprep.subr.mxu0 0.0
    %263 = vmatpush1.msra.mxu0 %v163
    %264 = vmatprep.subr.mxu0 0.0
    %265 = vmatpush1.msra.mxu0 %v164
    %266 = vmatprep.subr.mxu0 0.0
    %267 = vmatpush1.msra.mxu0 %v165
    %268 = vmatprep.subr.mxu0 0.0
    %269 = vmatpush1.msra.mxu0 %v166
    %270 = vmatprep.subr.mxu0 0.0
    %271 = vmatpush1.msra.mxu0 %v167
    %272 = vmatprep.subr.mxu0 0.0
    %273 = vmatpush1.msra.mxu0 %v168
    %274 = vmatprep.subr.mxu0 0.0
    %275 = vmatpush1.msra.mxu0 0.0
    %276 = vmatprep.subr.mxu0 0.0
    %277 = vmatpush1.msra.mxu0 0.0
    %278 = vmatprep.subr.mxu0 0.0
    %279 = vmatpush1.msra.mxu0 0.0
    %280 = vmatprep.subr.mxu0 0.0
    %281 = vmatpush1.msra.mxu0 0.0
    %282 = vmatprep.subr.mxu0 0.0
    %283 = vmatpush1.msra.mxu0 0.0
    %284 = vmatprep.subr.mxu0 0.0
    %285 = vmatpush1.msra.mxu0 0.0
    %286 = vmatprep.subr.mxu0 0.0
    %287 = vmatpush1.msra.mxu0 0.0
    %288 = vmatprep.subr.mxu0 0.0
    %289 = vmatpush1.msra.mxu0 0.0
    %290 = vmatprep.subr.mxu0 0.0
    %291 = vmatpush1.msra.mxu0 0.0
    %292 = vmatprep.subr.mxu0 0.0
    %293 = vmatpush1.msra.mxu0 0.0
    %294 = vmatprep.subr.mxu0 0.0
    %295 = vmatpush1.msra.mxu0 0.0
    %296 = vmatprep.subr.mxu0 0.0
    %297 = vmatpush1.msra.mxu0 0.0
    %298 = vmatprep.subr.mxu0 0.0
    %299 = vmatpush1.msra.mxu0 0.0
    %300 = vmatprep.subr.mxu0 0.0
    %301 = vmatpush1.msra.mxu0 0.0
    %302 = vmatprep.subr.mxu0 0.0
    %303 = vmatpush1.msra.mxu0 0.0
    %304 = vmatprep.subr.mxu0 0.0
    %305 = vmatpush1.msra.mxu0 0.0
    %306 = vmatprep.mubr.f32.mxu0 0.0
    %307 = vmatmul.mubr.f32.gmra.mrb[0].mxu0 %v240
    %v308 = vpop.f32.mrb[0].mxu0
    %v309 = vadd.f32 0.0, %v308
    %v310 = vpop.f32.mrb[0].mxu0
    %311 = vdwg.mxu0
    %v312 = vadd.f32 %v241, %v309
    %v313 = vtanh.pop %v312
    %v314 = vld [vmem:[%s101] sm:$0xff]
    %315 = vmatprep.subr.mxu0 0.0
    %316 = vmatpush1.msra.mxu0 %v153
    %317 = vmatprep.subr.mxu0 0.0
    %318 = vmatpush1.msra.mxu0 %v154
    %319 = vmatprep.subr.mxu0 0.0
    %320 = vmatpush1.msra.mxu0 %v155
    %321 = vmatprep.subr.mxu0 0.0
    %322 = vmatpush1.msra.mxu0 %v156
    %323 = vmatprep.subr.mxu0 0.0
    %324 = vmatpush1.msra.mxu0 %v157
    %325 = vmatprep.subr.mxu0 0.0
    %326 = vmatpush1.msra.mxu0 %v158
    %327 = vmatprep.subr.mxu0 0.0
    %328 = vmatpush1.msra.mxu0 %v159
    %329 = vmatprep.subr.mxu0 0.0
    %330 = vmatpush1.msra.mxu0 %v160
    %331 = vmatprep.subr.mxu0 0.0
    %332 = vmatpush1.msra.mxu0 %v161
    %333 = vmatprep.subr.mxu0 0.0
    %334 = vmatpush1.msra.mxu0 %v162
    %335 = vmatprep.subr.mxu0 0.0
    %336 = vmatpush1.msra.mxu0 %v163
    %337 = vmatprep.subr.mxu0 0.0
    %338 = vmatpush1.msra.mxu0 %v164
    %339 = vmatprep.subr.mxu0 0.0
    %340 = vmatpush1.msra.mxu0 %v165
    %341 = vmatprep.subr.mxu0 0.0
    %342 = vmatpush1.msra.mxu0 %v166
    %343 = vmatprep.subr.mxu0 0.0
    %344 = vmatpush1.msra.mxu0 %v167
    %345 = vmatprep.subr.mxu0 0.0
    %346 = vmatpush1.msra.mxu0 %v168
    %347 = vmatprep.subr.mxu0 0.0
    %348 = vmatpush1.msra.mxu0 0.0
    %349 = vmatprep.subr.mxu0 0.0
    %350 = vmatpush1.msra.mxu0 0.0
    %351 = vmatprep.subr.mxu0 0.0
    %352 = vmatpush1.msra.mxu0 0.0
    %353 = vmatprep.subr.mxu0 0.0
    %354 = vmatpush1.msra.mxu0 0.0
    %355 = vmatprep.subr.mxu0 0.0
    %356 = vmatpush1.msra.mxu0 0.0
    %357 = vmatprep.subr.mxu0 0.0
    %358 = vmatpush1.msra.mxu0 0.0
    %359 = vmatprep.subr.mxu0 0.0
    %360 = vmatpush1.msra.mxu0 0.0
    %361 = vmatprep.subr.mxu0 0.0
    %362 = vmatpush1.msra.mxu0 0.0
    %363 = vmatprep.subr.mxu0 0.0
    %364 = vmatpush1.msra.mxu0 0.0
    %365 = vmatprep.subr.mxu0 0.0
    %366 = vmatpush1.msra.mxu0 0.0
    %367 = vmatprep.subr.mxu0 0.0
    %368 = vmatpush1.msra.mxu0 0.0
    %369 = vmatprep.subr.mxu0 0.0
    %370 = vmatpush1.msra.mxu0 0.0
    %371 = vmatprep.subr.mxu0 0.0
    %372 = vmatpush1.msra.mxu0 0.0
    %373 = vmatprep.subr.mxu0 0.0
    %374 = vmatpush1.msra.mxu0 0.0
    %375 = vmatprep.subr.mxu0 0.0
    %376 = vmatpush1.msra.mxu0 0.0
    %377 = vmatprep.subr.mxu0 0.0
    %378 = vmatpush1.msra.mxu0 0.0
    %379 = vmatprep.mubr.f32.mxu0 0.0
    %380 = vmatmul.mubr.f32.gmra.mrb[0].mxu0 %v313
    %v381 = vpop.f32.mrb[0].mxu0
    %v382 = vadd.f32 0.0, %v381
    %v383 = vpop.f32.mrb[0].mxu0
    %384 = vdwg.mxu0
    %v385 = vadd.f32 %v314, %v382
    %v386 = vtanh.pop %v385
    %v387 = vld [vmem:[%s110] sm:$0xff]
    %388 = vmatprep.subr.mxu0 0.0
    %389 = vmatpush1.msra.mxu0 %v153
    %390 = vmatprep.subr.mxu0 0.0
    %391 = vmatpush1.msra.mxu0 %v154
    %392 = vmatprep.subr.mxu0 0.0
    %393 = vmatpush1.msra.mxu0 %v155
    %394 = vmatprep.subr.mxu0 0.0
    %395 = vmatpush1.msra.mxu0 %v156
    %396 = vmatprep.subr.mxu0 0.0
    %397 = vmatpush1.msra.mxu0 %v157
    %398 = vmatprep.subr.mxu0 0.0
    %399 = vmatpush1.msra.mxu0 %v158
    %400 = vmatprep.subr.mxu0 0.0
    %401 = vmatpush1.msra.mxu0 %v159
    %402 = vmatprep.subr.mxu0 0.0
    %403 = vmatpush1.msra.mxu0 %v160
    %404 = vmatprep.subr.mxu0 0.0
    %405 = vmatpush1.msra.mxu0 %v161
    %406 = vmatprep.subr.mxu0 0.0
    %407 = vmatpush1.msra.mxu0 %v162
    %408 = vmatprep.subr.mxu0 0.0
    %409 = vmatpush1.msra.mxu0 %v163
    %410 = vmatprep.subr.mxu0 0.0
    %411 = vmatpush1.msra.mxu0 %v164
    %412 = vmatprep.subr.mxu0 0.0
    %413 = vmatpush1.msra.mxu0 %v165
    %414 = vmatprep.subr.mxu0 0.0
    %415 = vmatpush1.msra.mxu0 %v166
    %416 = vmatprep.subr.mxu0 0.0
    %417 = vmatpush1.msra.mxu0 %v167
    %418 = vmatprep.subr.mxu0 0.0
    %419 = vmatpush1.msra.mxu0 %v168
    %420 = vmatprep.subr.mxu0 0.0
    %421 = vmatpush1.msra.mxu0 0.0
    %422 = vmatprep.subr.mxu0 0.0
    %423 = vmatpush1.msra.mxu0 0.0
    %424 = vmatprep.subr.mxu0 0.0
    %425 = vmatpush1.msra.mxu0 0.0
    %426 = vmatprep.subr.mxu0 0.0
    %427 = vmatpush1.msra.mxu0 0.0
    %428 = vmatprep.subr.mxu0 0.0
    %429 = vmatpush1.msra.mxu0 0.0
    %430 = vmatprep.subr.mxu0 0.0
    %431 = vmatpush1.msra.mxu0 0.0
    %432 = vmatprep.subr.mxu0 0.0
    %433 = vmatpush1.msra.mxu0 0.0
    %434 = vmatprep.subr.mxu0 0.0
    %435 = vmatpush1.msra.mxu0 0.0
    %436 = vmatprep.subr.mxu0 0.0
    %437 = vmatpush1.msra.mxu0 0.0
    %438 = vmatprep.subr.mxu0 0.0
    %439 = vmatpush1.msra.mxu0 0.0
    %440 = vmatprep.subr.mxu0 0.0
    %441 = vmatpush1.msra.mxu0 0.0
    %442 = vmatprep.subr.mxu0 0.0
    %443 = vmatpush1.msra.mxu0 0.0
    %444 = vmatprep.subr.mxu0 0.0
    %445 = vmatpush1.msra.mxu0 0.0
    %446 = vmatprep.subr.mxu0 0.0
    %447 = vmatpush1.msra.mxu0 0.0
    %448 = vmatprep.subr.mxu0 0.0
    %449 = vmatpush1.msra.mxu0 0.0
    %450 = vmatprep.subr.mxu0 0.0
    %451 = vmatpush1.msra.mxu0 0.0
    %452 = vmatprep.mubr.f32.mxu0 0.0
    %453 = vmatmul.mubr.f32.gmra.mrb[0].mxu0 %v386
    %v454 = vpop.f32.mrb[0].mxu0
    %v455 = vadd.f32 0.0, %v454
    %v456 = vpop.f32.mrb[0].mxu0
    %457 = vdwg.mxu0
    %v458 = vadd.f32 %v387, %v455
    %v459 = vtanh.pop %v458
    %v460 = vld [vmem:[%s119] sm:$0xff]
    %461 = vmatprep.subr.mxu0 0.0
    %462 = vmatpush1.msra.mxu0 %v153
    %463 = vmatprep.subr.mxu0 0.0
    %464 = vmatpush1.msra.mxu0 %v154
    %465 = vmatprep.subr.mxu0 0.0
    %466 = vmatpush1.msra.mxu0 %v155
    %467 = vmatprep.subr.mxu0 0.0
    %468 = vmatpush1.msra.mxu0 %v156
    %469 = vmatprep.subr.mxu0 0.0
    %470 = vmatpush1.msra.mxu0 %v157
    %471 = vmatprep.subr.mxu0 0.0
    %472 = vmatpush1.msra.mxu0 %v158
    %473 = vmatprep.subr.mxu0 0.0
    %474 = vmatpush1.msra.mxu0 %v159
    %475 = vmatprep.subr.mxu0 0.0
    %476 = vmatpush1.msra.mxu0 %v160
    %477 = vmatprep.subr.mxu0 0.0
    %478 = vmatpush1.msra.mxu0 %v161
    %479 = vmatprep.subr.mxu0 0.0
    %480 = vmatpush1.msra.mxu0 %v162
    %481 = vmatprep.subr.mxu0 0.0
    %482 = vmatpush1.msra.mxu0 %v163
    %483 = vmatprep.subr.mxu0 0.0
    %484 = vmatpush1.msra.mxu0 %v164
    %485 = vmatprep.subr.mxu0 0.0
    %486 = vmatpush1.msra.mxu0 %v165
    %487 = vmatprep.subr.mxu0 0.0
    %488 = vmatpush1.msra.mxu0 %v166
    %489 = vmatprep.subr.mxu0 0.0
    %490 = vmatpush1.msra.mxu0 %v167
    %491 = vmatprep.subr.mxu0 0.0
    %492 = vmatpush1.msra.mxu0 %v168
    %493 = vmatprep.subr.mxu0 0.0
    %494 = vmatpush1.msra.mxu0 0.0
    %495 = vmatprep.subr.mxu0 0.0
    %496 = vmatpush1.msra.mxu0 0.0
    %497 = vmatprep.subr.mxu0 0.0
    %498 = vmatpush1.msra.mxu0 0.0
    %499 = vmatprep.subr.mxu0 0.0
    %500 = vmatpush1.msra.mxu0 0.0
    %501 = vmatprep.subr.mxu0 0.0
    %502 = vmatpush1.msra.mxu0 0.0
    %503 = vmatprep.subr.mxu0 0.0
    %504 = vmatpush1.msra.mxu0 0.0
    %505 = vmatprep.subr.mxu0 0.0
    %506 = vmatpush1.msra.mxu0 0.0
    %507 = vmatprep.subr.mxu0 0.0
    %508 = vmatpush1.msra.mxu0 0.0
    %509 = vmatprep.subr.mxu0 0.0
    %510 = vmatpush1.msra.mxu0 0.0
    %511 = vmatprep.subr.mxu0 0.0
    %512 = vmatpush1.msra.mxu0 0.0
    %513 = vmatprep.subr.mxu0 0.0
    %514 = vmatpush1.msra.mxu0 0.0
    %515 = vmatprep.subr.mxu0 0.0
    %516 = vmatpush1.msra.mxu0 0.0
    %517 = vmatprep.subr.mxu0 0.0
    %518 = vmatpush1.msra.mxu0 0.0
    %519 = vmatprep.subr.mxu0 0.0
    %520 = vmatpush1.msra.mxu0 0.0
    %521 = vmatprep.subr.mxu0 0.0
    %522 = vmatpush1.msra.mxu0 0.0
    %523 = vmatprep.subr.mxu0 0.0
    %524 = vmatpush1.msra.mxu0 0.0
    %525 = vmatprep.mubr.f32.mxu0 0.0
    %526 = vmatmul.mubr.f32.gmra.mrb[0].mxu0 %v459
    %v527 = vpop.f32.mrb[0].mxu0
    %v528 = vadd.f32 0.0, %v527
    %v529 = vpop.f32.mrb[0].mxu0
    %530 = vdwg.mxu0
    %v531 = vadd.f32 %v460, %v528
    %v532 = vtanh.pop %v531
    %v533 = vld [vmem:[%s128] sm:$0xff]
    %534 = vmatprep.subr.mxu0 0.0
    %535 = vmatpush1.msra.mxu0 %v153
    %536 = vmatprep.subr.mxu0 0.0
    %537 = vmatpush1.msra.mxu0 %v154
    %538 = vmatprep.subr.mxu0 0.0
    %539 = vmatpush1.msra.mxu0 %v155
    %540 = vmatprep.subr.mxu0 0.0
    %541 = vmatpush1.msra.mxu0 %v156
    %542 = vmatprep.subr.mxu0 0.0
    %543 = vmatpush1.msra.mxu0 %v157
    %544 = vmatprep.subr.mxu0 0.0
    %545 = vmatpush1.msra.mxu0 %v158
    %546 = vmatprep.subr.mxu0 0.0
    %547 = vmatpush1.msra.mxu0 %v159
    %548 = vmatprep.subr.mxu0 0.0
    %549 = vmatpush1.msra.mxu0 %v160
    %550 = vmatprep.subr.mxu0 0.0
    %551 = vmatpush1.msra.mxu0 %v161
    %552 = vmatprep.subr.mxu0 0.0
    %553 = vmatpush1.msra.mxu0 %v162
    %554 = vmatprep.subr.mxu0 0.0
    %555 = vmatpush1.msra.mxu0 %v163
    %556 = vmatprep.subr.mxu0 0.0
    %557 = vmatpush1.msra.mxu0 %v164
    %558 = vmatprep.subr.mxu0 0.0
    %559 = vmatpush1.msra.mxu0 %v165
    %560 = vmatprep.subr.mxu0 0.0
    %561 = vmatpush1.msra.mxu0 %v166
    %562 = vmatprep.subr.mxu0 0.0
    %563 = vmatpush1.msra.mxu0 %v167
    %564 = vmatprep.subr.mxu0 0.0
    %565 = vmatpush1.msra.mxu0 %v168
    %566 = vmatprep.subr.mxu0 0.0
    %567 = vmatpush1.msra.mxu0 0.0
    %568 = vmatprep.subr.mxu0 0.0
    %569 = vmatpush1.msra.mxu0 0.0
    %570 = vmatprep.subr.mxu0 0.0
    %571 = vmatpush1.msra.mxu0 0.0
    %572 = vmatprep.subr.mxu0 0.0
    %573 = vmatpush1.msra.mxu0 0.0
    %574 = vmatprep.subr.mxu0 0.0
    %575 = vmatpush1.msra.mxu0 0.0
    %576 = vmatprep.subr.mxu0 0.0
    %577 = vmatpush1.msra.mxu0 0.0
    %578 = vmatprep.subr.mxu0 0.0
    %579 = vmatpush1.msra.mxu0 0.0
    %580 = vmatprep.subr.mxu0 0.0
    %581 = vmatpush1.msra.mxu0 0.0
    %582 = vmatprep.subr.mxu0 0.0
    %583 = vmatpush1.msra.mxu0 0.0
    %584 = vmatprep.subr.mxu0 0.0
    %585 = vmatpush1.msra.mxu0 0.0
    %586 = vmatprep.subr.mxu0 0.0
    %587 = vmatpush1.msra.mxu0 0.0
    %588 = vmatprep.subr.mxu0 0.0
    %589 = vmatpush1.msra.mxu0 0.0
    %590 = vmatprep.subr.mxu0 0.0
    %591 = vmatpush1.msra.mxu0 0.0
    %592 = vmatprep.subr.mxu0 0.0
    %593 = vmatpush1.msra.mxu0 0.0
    %594 = vmatprep.subr.mxu0 0.0
    %595 = vmatpush1.msra.mxu0 0.0
    %596 = vmatprep.subr.mxu0 0.0
    %597 = vmatpush1.msra.mxu0 0.0
    %598 = vmatprep.mubr.f32.mxu0 0.0
    %599 = vmatmul.mubr.f32.gmra.mrb[0].mxu0 %v532
    %v600 = vpop.f32.mrb[0].mxu0
    %v601 = vadd.f32 0.0, %v600
    %v602 = vpop.f32.mrb[0].mxu0
    %603 = vdwg.mxu0
    %v604 = vadd.f32 %v533, %v601
    %v605 = vtanh.pop %v604
    %v606 = vld [vmem:[%s137] sm:$0xff]
    %607 = vmatprep.subr.mxu0 0.0
    %608 = vmatpush1.msra.mxu0 %v153
    %609 = vmatprep.subr.mxu0 0.0
    %610 = vmatpush1.msra.mxu0 %v154
    %611 = vmatprep.subr.mxu0 0.0
    %612 = vmatpush1.msra.mxu0 %v155
    %613 = vmatprep.subr.mxu0 0.0
    %614 = vmatpush1.msra.mxu0 %v156
    %615 = vmatprep.subr.mxu0 0.0
    %616 = vmatpush1.msra.mxu0 %v157
    %617 = vmatprep.subr.mxu0 0.0
    %618 = vmatpush1.msra.mxu0 %v158
    %619 = vmatprep.subr.mxu0 0.0
    %620 = vmatpush1.msra.mxu0 %v159
    %621 = vmatprep.subr.mxu0 0.0
    %622 = vmatpush1.msra.mxu0 %v160
    %623 = vmatprep.subr.mxu0 0.0
    %624 = vmatpush1.msra.mxu0 %v161
    %625 = vmatprep.subr.mxu0 0.0
    %626 = vmatpush1.msra.mxu0 %v162
    %627 = vmatprep.subr.mxu0 0.0
    %628 = vmatpush1.msra.mxu0 %v163
    %629 = vmatprep.subr.mxu0 0.0
    %630 = vmatpush1.msra.mxu0 %v164
    %631 = vmatprep.subr.mxu0 0.0
    %632 = vmatpush1.msra.mxu0 %v165
    %633 = vmatprep.subr.mxu0 0.0
    %634 = vmatpush1.msra.mxu0 %v166
    %635 = vmatprep.subr.mxu0 0.0
    %636 = vmatpush1.msra.mxu0 %v167
    %637 = vmatprep.subr.mxu0 0.0
    %638 = vmatpush1.msra.mxu0 %v168
    %639 = vmatprep.subr.mxu0 0.0
    %640 = vmatpush1.msra.mxu0 0.0
    %641 = vmatprep.subr.mxu0 0.0
    %642 = vmatpush1.msra.mxu0 0.0
    %643 = vmatprep.subr.mxu0 0.0
    %644 = vmatpush1.msra.mxu0 0.0
    %645 = vmatprep.subr.mxu0 0.0
    %646 = vmatpush1.msra.mxu0 0.0
    %647 = vmatprep.subr.mxu0 0.0
    %648 = vmatpush1.msra.mxu0 0.0
    %649 = vmatprep.subr.mxu0 0.0
    %650 = vmatpush1.msra.mxu0 0.0
    %651 = vmatprep.subr.mxu0 0.0
    %652 = vmatpush1.msra.mxu0 0.0
    %653 = vmatprep.subr.mxu0 0.0
    %654 = vmatpush1.msra.mxu0 0.0
    %655 = vmatprep.subr.mxu0 0.0
    %656 = vmatpush1.msra.mxu0 0.0
    %657 = vmatprep.subr.mxu0 0.0
    %658 = vmatpush1.msra.mxu0 0.0
    %659 = vmatprep.subr.mxu0 0.0
    %660 = vmatpush1.msra.mxu0 0.0
    %661 = vmatprep.subr.mxu0 0.0
    %662 = vmatpush1.msra.mxu0 0.0
    %663 = vmatprep.subr.mxu0 0.0
    %664 = vmatpush1.msra.mxu0 0.0
    %665 = vmatprep.subr.mxu0 0.0
    %666 = vmatpush1.msra.mxu0 0.0
    %667 = vmatprep.subr.mxu0 0.0
    %668 = vmatpush1.msra.mxu0 0.0
    %669 = vmatprep.subr.mxu0 0.0
    %670 = vmatpush1.msra.mxu0 0.0
    %671 = vmatprep.mubr.f32.mxu0 0.0
    %672 = vmatmul.mubr.f32.gmra.mrb[0].mxu0 %v605
    %v673 = vpop.f32.mrb[0].mxu0
    %v674 = vadd.f32 0.0, %v673
    %v675 = vpop.f32.mrb[0].mxu0
    %676 = vdwg.mxu0
    %v677 = vadd.f32 %v606, %v674
    %v678 = vtanh.pop %v677
    %v679 = vld [vmem:[%s146] sm:$0xff]
    %680 = vmatprep.subr.mxu0 0.0
    %681 = vmatpush1.msra.mxu0 %v153
    %682 = vmatprep.subr.mxu0 0.0
    %683 = vmatpush1.msra.mxu0 %v154
    %684 = vmatprep.subr.mxu0 0.0
    %685 = vmatpush1.msra.mxu0 %v155
    %686 = vmatprep.subr.mxu0 0.0
    %687 = vmatpush1.msra.mxu0 %v156
    %688 = vmatprep.subr.mxu0 0.0
    %689 = vmatpush1.msra.mxu0 %v157
    %690 = vmatprep.subr.mxu0 0.0
    %691 = vmatpush1.msra.mxu0 %v158
    %692 = vmatprep.subr.mxu0 0.0
    %693 = vmatpush1.msra.mxu0 %v159
    %694 = vmatprep.subr.mxu0 0.0
    %695 = vmatpush1.msra.mxu0 %v160
    %696 = vmatprep.subr.mxu0 0.0
    %697 = vmatpush1.msra.mxu0 %v161
    %698 = vmatprep.subr.mxu0 0.0
    %699 = vmatpush1.msra.mxu0 %v162
    %700 = vmatprep.subr.mxu0 0.0
    %701 = vmatpush1.msra.mxu0 %v163
    %702 = vmatprep.subr.mxu0 0.0
    %703 = vmatpush1.msra.mxu0 %v164
    %704 = vmatprep.subr.mxu0 0.0
    %705 = vmatpush1.msra.mxu0 %v165
    %706 = vmatprep.subr.mxu0 0.0
    %707 = vmatpush1.msra.mxu0 %v166
    %708 = vmatprep.subr.mxu0 0.0
    %709 = vmatpush1.msra.mxu0 %v167
    %710 = vmatprep.subr.mxu0 0.0
    %711 = vmatpush1.msra.mxu0 %v168
    %712 = vmatprep.subr.mxu0 0.0
    %713 = vmatpush1.msra.mxu0 0.0
    %714 = vmatprep.subr.mxu0 0.0
    %715 = vmatpush1.msra.mxu0 0.0
    %716 = vmatprep.subr.mxu0 0.0
    %717 = vmatpush1.msra.mxu0 0.0
    %718 = vmatprep.subr.mxu0 0.0
    %719 = vmatpush1.msra.mxu0 0.0
    %720 = vmatprep.subr.mxu0 0.0
    %721 = vmatpush1.msra.mxu0 0.0
    %722 = vmatprep.subr.mxu0 0.0
    %723 = vmatpush1.msra.mxu0 0.0
    %724 = vmatprep.subr.mxu0 0.0
    %725 = vmatpush1.msra.mxu0 0.0
    %726 = vmatprep.subr.mxu0 0.0
    %727 = vmatpush1.msra.mxu0 0.0
    %728 = vmatprep.subr.mxu0 0.0
    %729 = vmatpush1.msra.mxu0 0.0
    %730 = vmatprep.subr.mxu0 0.0
    %731 = vmatpush1.msra.mxu0 0.0
    %732 = vmatprep.subr.mxu0 0.0
    %733 = vmatpush1.msra.mxu0 0.0
    %734 = vmatprep.subr.mxu0 0.0
    %735 = vmatpush1.msra.mxu0 0.0
    %736 = vmatprep.subr.mxu0 0.0
    %737 = vmatpush1.msra.mxu0 0.0
    %738 = vmatprep.subr.mxu0 0.0
    %739 = vmatpush1.msra.mxu0 0.0
    %740 = vmatprep.subr.mxu0 0.0
    %741 = vmatpush1.msra.mxu0 0.0
    %742 = vmatprep.subr.mxu0 0.0
    %743 = vmatpush1.msra.mxu0 0.0
    %744 = vmatprep.mubr.f32.mxu0 0.0
    %745 = vmatmul.mubr.f32.gmra.mrb[0].mxu0 %v678
    %v746 = vpop.f32.mrb[0].mxu0
    %v747 = vadd.f32 0.0, %v746
    %v748 = vpop.f32.mrb[0].mxu0
    %749 = vdwg.mxu0
    %v750 = vadd.f32 %v679, %v747
    %v751 = vtanh.pop %v750
    %v752 = vld [vmem:[#allocation10] sm:$0xff]
    %v753 = vld [vmem:[#allocation10 + $0x8] sm:$0xff]
    %v754 = vld [vmem:[#allocation10 + $0x10] sm:$0xff]
    %v755 = vld [vmem:[#allocation10 + $0x18] sm:$0xff]
    %v756 = vld [vmem:[#allocation10 + $0x20] sm:$0xff]
    %v757 = vld [vmem:[#allocation10 + $0x28] sm:$0xff]
    %v758 = vld [vmem:[#allocation10 + $0x30] sm:$0xff]
    %v759 = vld [vmem:[#allocation10 + $0x38] sm:$0xff]
    %v760 = vld [vmem:[#allocation10 + $0x40] sm:$0xff]
    %v761 = vld [vmem:[#allocation10 + $0x48] sm:$0xff]
    %v762 = vld [vmem:[#allocation10 + $0x50] sm:$0xff]
    %v763 = vld [vmem:[#allocation10 + $0x58] sm:$0xff]
    %v764 = vld [vmem:[#allocation10 + $0x60] sm:$0xff]
    %v765 = vld [vmem:[#allocation10 + $0x68] sm:$0xff]
    %v766 = vld [vmem:[#allocation10 + $0x70] sm:$0xff]
    %v767 = vld [vmem:[#allocation10 + $0x78] sm:$0xff]
    %v768 = vld [vmem:[%s4] sm:$0x1]
    %v770 = vlaneseq
    %v771 = vshrl.u32 %v770, 7
    %v772 = vsub.s32 0, %v771
    %v773 = vrot.slane %v768, %v772
    %775 = vmatprep.subr.mxu0 0.0
    %776 = vmatpush1.msra.mxu0 %v752
    %777 = vmatprep.subr.mxu0 0.0
    %778 = vmatpush1.msra.mxu0 %v753
    %779 = vmatprep.subr.mxu0 0.0
    %780 = vmatpush1.msra.mxu0 %v754
    %781 = vmatprep.subr.mxu0 0.0
    %782 = vmatpush1.msra.mxu0 %v755
    %783 = vmatprep.subr.mxu0 0.0
    %784 = vmatpush1.msra.mxu0 %v756
    %785 = vmatprep.subr.mxu0 0.0
    %786 = vmatpush1.msra.mxu0 %v757
    %787 = vmatprep.subr.mxu0 0.0
    %788 = vmatpush1.msra.mxu0 %v758
    %789 = vmatprep.subr.mxu0 0.0
    %790 = vmatpush1.msra.mxu0 %v759
    %791 = vmatprep.subr.mxu0 0.0
    %792 = vmatpush1.msra.mxu0 %v760
    %793 = vmatprep.subr.mxu0 0.0
    %794 = vmatpush1.msra.mxu0 %v761
    %795 = vmatprep.subr.mxu0 0.0
    %796 = vmatpush1.msra.mxu0 %v762
    %797 = vmatprep.subr.mxu0 0.0
    %798 = vmatpush1.msra.mxu0 %v763
    %799 = vmatprep.subr.mxu0 0.0
    %800 = vmatpush1.msra.mxu0 %v764
    %801 = vmatprep.subr.mxu0 0.0
    %802 = vmatpush1.msra.mxu0 %v765
    %803 = vmatprep.subr.mxu0 0.0
    %804 = vmatpush1.msra.mxu0 %v766
    %805 = vmatprep.subr.mxu0 0.0
    %806 = vmatpush1.msra.mxu0 %v767
    %807 = vmatprep.subr.mxu0 0.0
    %808 = vmatpush1.msra.mxu0 0.0
    %809 = vmatprep.subr.mxu0 0.0
    %810 = vmatpush1.msra.mxu0 0.0
    %811 = vmatprep.subr.mxu0 0.0
    %812 = vmatpush1.msra.mxu0 0.0
    %813 = vmatprep.subr.mxu0 0.0
    %814 = vmatpush1.msra.mxu0 0.0
    %815 = vmatprep.subr.mxu0 0.0
    %816 = vmatpush1.msra.mxu0 0.0
    %817 = vmatprep.subr.mxu0 0.0
    %818 = vmatpush1.msra.mxu0 0.0
    %819 = vmatprep.subr.mxu0 0.0
    %820 = vmatpush1.msra.mxu0 0.0
    %821 = vmatprep.subr.mxu0 0.0
    %822 = vmatpush1.msra.mxu0 0.0
    %823 = vmatprep.subr.mxu0 0.0
    %824 = vmatpush1.msra.mxu0 0.0
    %825 = vmatprep.subr.mxu0 0.0
    %826 = vmatpush1.msra.mxu0 0.0
    %827 = vmatprep.subr.mxu0 0.0
    %828 = vmatpush1.msra.mxu0 0.0
    %829 = vmatprep.subr.mxu0 0.0
    %830 = vmatpush1.msra.mxu0 0.0
    %831 = vmatprep.subr.mxu0 0.0
    %832 = vmatpush1.msra.mxu0 0.0
    %833 = vmatprep.subr.mxu0 0.0
    %834 = vmatpush1.msra.mxu0 0.0
    %835 = vmatprep.subr.mxu0 0.0
    %836 = vmatpush1.msra.mxu0 0.0
    %837 = vmatprep.subr.mxu0 0.0
    %838 = vmatpush1.msra.mxu0 0.0
    %839 = vmatprep.mubr.f32.mxu0 0.0
    %840 = vmatmul.mubr.f32.gmra.mrb[0].mxu0 %v751
    %v841 = vpop.f32.mrb[0].mxu0
    %v842 = vadd.f32 %v773, %v841
    %v843 = vpop.f32.mrb[0].mxu0
    %844 = vdwg.mxu0
    %845 = vst [vmem:[#allocation11] sm:$0xff] %v842
    // Predicated region
    $region38: #{tpu_custom_call.1} parent=1 // pred_check
      _
    $region39: #{tpu_custom_call.1} parent=1 // pred_check_branch
      %847 = sbr.rel (0) target = $region41
    $region40: #{tpu_custom_call.1} parent=1 // pred_region
      %s849 = ssub.s32 128, 128
      %850 = vsyncadd [#allocation5], %s849
      %s852 = sshll.u32 [#allocation11], 4
      %s853 = int_to_ptr.vmem [resolvable:$true] %s852
      %855 = dma.vmem_to_hbm [thread:$0]  %s853, 128, %s5, [#allocation5]
    $region41: #{tpu_custom_call.1} parent=1 // pred_fallthru
      _
    // Predicated region
    $region42: #{tpu_custom_call.1} parent=1 // pred_check
      _
    $region43: #{tpu_custom_call.1} parent=1 // pred_check_branch
      %857 = sbr.rel (0) target = $region45
    $region44: #{tpu_custom_call.1} parent=1 // pred_region
      %858 = dma.done [#allocation5], 128
    $region45: #{tpu_custom_call.1} parent=1 // pred_fallthru
      _
    %859 = vsyncpa [#allocation4], 1
    %860 = vsyncpa [#allocation9], 1
    %861 = vsyncpa [#allocation5], 1
    %862 = vsyncpa [#allocation6], 1

</llo_original>
